<compile_context>
chip_gen: v6e
topology: v6e:2x2x1
jax: 0.10.0
libtpu: 0.0.40
codegen_flags: <defaults>
</compile_context>

<pallas_src>
import math
from functools import partial

import jax
import jax.numpy as jnp
from jax.experimental import pallas as pl
from jax.experimental.pallas import tpu as pltpu


def lsa_kernel(scale_ref, x_ref, wqkv_ref, wp_ref, b_ref, mask_ref, o_ref,
               qkv_scr, o_scr, *, num_heads, head_dim, b_tile, seq_len):
    """One grid step = b_tile batch elements.

    qkv_scr: VMEM (3*H, BT*N, D) bf16 -- per-head q|k|v after the fused projection.
    o_scr:   VMEM (H,   BT*N, D) bf16 -- per-head attention outputs before projection.
    """
    H, D, N, BT = num_heads, head_dim, seq_len, b_tile
    HD = H * D
    Dm = x_ref.shape[-1]
    R = BT * N                                    # rows of the 2-D GEMM view

    scale = scale_ref[0, 0]                       # exp(scaleFactor), f32 scalar (SMEM)

    # ---- (1) Fused QKV projection: one lane-dense matmul, f32 accumulation. -------
    x2d = x_ref[...].reshape(R, Dm)                               # bf16, leading merge
    qkv = jnp.dot(x2d, wqkv_ref[...],
                  preferred_element_type=jnp.float32)             # (R, 3*H*D) f32

    # ---- (2) One relayout: packed lanes -> per-head chunks in VMEM scratch. -------
    # Static lane slices of the packed result; the learnable scale is folded into q
    # at the single f32 -> bf16 downcast point (q heads occupy the first H*D columns).
    for c in range(3 * H):
        chunk = qkv[:, c * D:(c + 1) * D]                         # (R, D) f32
        if c < H:
            chunk = chunk * scale
        qkv_scr[c] = chunk.astype(jnp.bfloat16)

    add_mask = mask_ref[...]                      # (N, N) additive diagonal mask, f32

    # ---- (3) Per-head attention; fori_loop bounds the (BT, N, N) live range. ------
    def head_body(h, carry):
        q = qkv_scr[h].reshape(BT, N, D)          # dynamic leading-index loads (bf16)
        k = qkv_scr[H + h].reshape(BT, N, D)
        v = qkv_scr[2 * H + h].reshape(BT, N, D)

        s = jnp.einsum("bnd,bmd->bnm", q, k,
                       preferred_element_type=jnp.float32)        # (BT, N, N) f32
        s = s + add_mask[None]                    # == masked_fill(diag, finfo.min)

        m = jnp.max(s, axis=-1, keepdims=True)
        p = jnp.exp(s - m)
        l = jnp.sum(p, axis=-1, keepdims=True)
        attn = p * pl.reciprocal(l, approx=True)                  # EUP reciprocal
        # dropout p = 0.0 -> identity

        o = jnp.einsum("bnm,bmd->bnd", attn.astype(jnp.bfloat16), v,
                       preferred_element_type=jnp.float32)        # (BT, N, D) f32
        o_scr[h] = o.reshape(R, D).astype(jnp.bfloat16)
        return carry

    jax.lax.fori_loop(0, H, head_body, 0)

    # ---- (4) Head-folded output projection: ONE (R, H*D) @ (H*D, Dm) matmul. ------
    o2d = jnp.concatenate([o_scr[c] for c in range(H)], axis=-1)  # (R, H*D) bf16
    out = jnp.dot(o2d, wp_ref[...],
                  preferred_element_type=jnp.float32)             # (R, Dm) f32
    out = out + b_ref[...]                                        # + bias (1, Dm)
    o_ref[...] = out.reshape(BT, N, Dm).astype(o_ref.dtype)


def _pick_b_tile(B, N, Dm, H, D, vmem_budget_bytes):
    """Largest divisor of B giving grid >= 2 whose rough per-step footprint fits."""
    Dl = max(D, 128)                      # lane padding of per-head scratch tiles

    def footprint(bt):
        R = bt * N
        fp = 0
        fp += 2 * R * Dm * 2              # x tile (bf16), double-buffered
        fp += 2 * R * Dm * 4              # out tile (f32), double-buffered
        fp += R * 3 * H * D * 4           # packed qkv matmul result (f32)
        fp += 3 * H * R * Dl * 2          # per-head q/k/v scratch (bf16, lane-padded)
        fp += 2 * bt * N * N * 4          # ONE head's scores + probs (f32)
        fp += H * R * Dl * 2              # per-head attention-output scratch (bf16)
        fp += R * (H * D + Dm) * 4        # packed o + projected output (upper bound)
        return fp

    divisors = [d for d in range(1, B + 1) if B % d == 0]
    cands = [d for d in divisors if B // d >= 2] or [1]
    for d in sorted(cands, reverse=True):
        if footprint(d) <= vmem_budget_bytes:
            return d
    return 1


def lsa_forward(x, w_qkv, w_proj, b_proj, log_scale, *, num_heads, head_dim,
                b_tile=None, vmem_limit_bytes=48 * 1024 * 1024):
    """x: [B,N,Dm] f32.  w_qkv: [3*H*D, Dm] (nn.Linear layout).  w_proj: [Dm, H*D].
       b_proj: [Dm].  log_scale: scalar (the learnable `scaleFactor` parameter)."""
    B, N, Dm = x.shape
    H, D = num_heads, head_dim
    HD = H * D
    assert w_qkv.shape == (3 * HD, Dm), w_qkv.shape
    assert w_proj.shape == (Dm, HD), w_proj.shape

    if b_tile is None:
        # grid >= 2 keeps both TensorCores busy on dual-core parts and pipelines the
        # x/out DMAs; budget ~half the scoped limit leaves double-buffer/weight headroom.
        b_tile = _pick_b_tile(B, N, Dm, H, D, vmem_budget_bytes=vmem_limit_bytes // 2)
    assert B % b_tile == 0, "batch must be divisible by b_tile"

    # One-time wrapper-side weight re-layout (nn.Linear [out,in] -> GEMM [in,out]).
    wqkv = w_qkv.T.astype(jnp.bfloat16)       # (Dm, 3*H*D), columns ordered (q|k|v, h, d)
    wp = w_proj.T.astype(jnp.bfloat16)        # (H*D, Dm)
    x_b = x.astype(jnp.bfloat16)              # MXU operands bf16; accumulation stays f32

    scale = jnp.exp(log_scale).reshape(1, 1).astype(jnp.float32)   # learnable temperature
    bias = b_proj.reshape(1, Dm).astype(jnp.float32)
    # Additive LSA diagonal mask, built once (equivalent to masked_fill on the diagonal
    # when only the diagonal is masked: exp() underflows to 0 either way).
    diag_mask = jnp.where(jnp.eye(N, dtype=bool),
                          jnp.finfo(jnp.float32).min, 0.0).astype(jnp.float32)

    kernel = partial(lsa_kernel, num_heads=H, head_dim=D, b_tile=b_tile, seq_len=N)

    return pl.pallas_call(
        kernel,
        out_shape=jax.ShapeDtypeStruct((B, N, Dm), jnp.float32),
        grid_spec=pltpu.PrefetchScalarGridSpec(
            num_scalar_prefetch=0,
            grid=(B // b_tile,),
            in_specs=[
                pl.BlockSpec(memory_space=pltpu.MemorySpace.SMEM),      # scale scalar
                pl.BlockSpec((b_tile, N, Dm), lambda i: (i, 0, 0)),     # x tile
                pl.BlockSpec((Dm, 3 * HD), lambda i: (0, 0)),           # fused Wqkv
                pl.BlockSpec((HD, Dm), lambda i: (0, 0)),               # Wproj
                pl.BlockSpec((1, Dm), lambda i: (0, 0)),                # bias
                pl.BlockSpec((N, N), lambda i: (0, 0)),                 # diag mask
            ],
            out_specs=pl.BlockSpec((b_tile, N, Dm), lambda i: (i, 0, 0)),
            scratch_shapes=[
                pltpu.VMEM((3 * H, b_tile * N, D), jnp.bfloat16),       # per-head q|k|v
                pltpu.VMEM((H, b_tile * N, D), jnp.bfloat16),           # per-head attn out
            ],
        ),
        compiler_params=pltpu.CompilerParams(
            dimension_semantics=("parallel",),    # batch-tile axis -> both TCs on v7x
            vmem_limit_bytes=vmem_limit_bytes,
        ),
    )(scale, x_b, wqkv, wp, bias, diag_mask)


def lsa_reference(x, w_qkv, w_proj, b_proj, log_scale, *, num_heads, head_dim):
    """Pure-JAX f32 reference of the PyTorch forward (mask=None, dropout off)."""
    B, N, Dm = x.shape
    H, D = num_heads, head_dim
    hd = H * D
    scale = jnp.exp(log_scale)
    qkv = x @ w_qkv.T                                     # (B, N, 3*hd)
    q, k, v = jnp.split(qkv, 3, axis=-1)

    def split_heads(t):                                   # b n (h d) -> b h n d
        return t.reshape(B, N, H, D).transpose(0, 2, 1, 3)

    q, k, v = map(split_heads, (q, k, v))
    s = jnp.einsum("bhnd,bhmd->bhnm", q, k) * scale
    eye = jnp.eye(N, dtype=bool)
    s = jnp.where(eye[None, None], jnp.finfo(s.dtype).min, s)   # LSA diagonal mask
    attn = jax.nn.softmax(s, axis=-1)
    o = jnp.einsum("bhnm,bhmd->bhnd", attn, v)
    o = o.transpose(0, 2, 1, 3).reshape(B, N, hd)         # b h n d -> b n (h d)
    return o @ w_proj.T + b_proj


if __name__ == "__main__":
    # Small shapes consistent with the module.
    B, N = 4, 8
    model_dim = 32
    num_heads = 2
    head_dim = 16
    proj_dim = num_heads * head_dim   # 32 (needFinalProjection=True since numHeads>1)

    key = jax.random.PRNGKey(0)
    kx, kqkv, kproj, kbias = jax.random.split(key, 4)

    x = jax.random.normal(kx, (B, N, model_dim), dtype=jnp.float32)

    # nn.Linear-style deterministic init, stored in PyTorch [out, in] layout.
    bound_qkv = 1.0 / math.sqrt(model_dim)
    w_qkv = jax.random.uniform(kqkv, (3 * proj_dim, model_dim),
                               minval=-bound_qkv, maxval=bound_qkv, dtype=jnp.float32)
    bound_proj = 1.0 / math.sqrt(proj_dim)
    w_proj = jax.random.uniform(kproj, (model_dim, proj_dim),
                                minval=-bound_proj, maxval=bound_proj, dtype=jnp.float32)
    b_proj = jax.random.uniform(kbias, (model_dim,),
                                minval=-bound_proj, maxval=bound_proj, dtype=jnp.float32)
    # scaleFactor = log(headDim ** -0.5)  (learnable temperature, at init value)
    log_scale = jnp.array(math.log(head_dim ** (-0.5)), dtype=jnp.float32)

    out = lsa_forward(x, w_qkv, w_proj, b_proj, log_scale,
                      num_heads=num_heads, head_dim=head_dim)   # default b_tile -> grid=2
    out = jax.block_until_ready(out)

    ref = lsa_reference(x, w_qkv, w_proj, b_proj, log_scale,
                        num_heads=num_heads, head_dim=head_dim)

    assert out.shape == (B, N, model_dim)
    # bf16 MXU operands with f32 accumulation vs pure-f32 reference.
    assert jnp.allclose(out, ref, atol=3e-2, rtol=3e-2), (
        "mismatch vs reference; max abs err = "
        f"{float(jnp.max(jnp.abs(out - ref)))}")

    print("KERNEL_OK")
</pallas_src>

<mosaic_0001>
module attributes {stable_mosaic.version = 11 : i64} {
  func.func @lsa_kernel(%arg0: i32, %arg1: memref<1x1xf32, #tpu.memory_space<smem>>, %arg2: memref<2x8x32xbf16, #tpu.memory_space<vmem>>, %arg3: memref<32x96xbf16, #tpu.memory_space<vmem>>, %arg4: memref<32x32xbf16, #tpu.memory_space<vmem>>, %arg5: memref<1x32xf32, #tpu.memory_space<vmem>>, %arg6: memref<8x8xf32, #tpu.memory_space<vmem>>, %arg7: memref<2x8x32xf32, #tpu.memory_space<vmem>>, %arg8: memref<6x16x16xbf16, #tpu.memory_space<vmem>>, %arg9: memref<2x16x16xbf16, #tpu.memory_space<vmem>>) attributes {dimension_semantics = [#tpu.dimension_semantics<parallel>], iteration_bounds = array<i64: 2>, scalar_prefetch = 0 : i64, scratch_operands = 2 : i64, tpu.core_type = #tpu.core_type<tc>, window_params = [{transform_indices = @transform_0, window_bounds = array<i64: 1, 1>}, {transform_indices = @transform_1, window_bounds = array<i64: 2, 8, 32>}, {pipeline_mode = #tpu.pipeline_mode<synchronous>, transform_indices = @transform_2, window_bounds = array<i64: 32, 96>}, {pipeline_mode = #tpu.pipeline_mode<synchronous>, transform_indices = @transform_3, window_bounds = array<i64: 32, 32>}, {pipeline_mode = #tpu.pipeline_mode<synchronous>, transform_indices = @transform_4, window_bounds = array<i64: 1, 32>}, {pipeline_mode = #tpu.pipeline_mode<synchronous>, transform_indices = @transform_5, window_bounds = array<i64: 8, 8>}, {transform_indices = @transform_6, window_bounds = array<i64: 2, 8, 32>}]} {
    %c0 = arith.constant 0 : index
    %c0_0 = arith.constant 0 : index
    %0 = memref.load %arg1[%c0, %c0_0] : memref<1x1xf32, #tpu.memory_space<smem>>
    %c0_1 = arith.constant 0 : index
    %c0_2 = arith.constant 0 : index
    %c0_3 = arith.constant 0 : index
    %1 = vector.load %arg2[%c0_1, %c0_2, %c0_3] : memref<2x8x32xbf16, #tpu.memory_space<vmem>>, vector<2x8x32xbf16>
    %2 = vector.shape_cast %1 : vector<2x8x32xbf16> to vector<16x32xbf16>
    %c0_4 = arith.constant 0 : index
    %c0_5 = arith.constant 0 : index
    %3 = vector.load %arg3[%c0_4, %c0_5] : memref<32x96xbf16, #tpu.memory_space<vmem>>, vector<32x96xbf16>
    %cst = arith.constant dense<0.000000e+00> : vector<16x96xf32>
    %4 = tpu.matmul %2, %3, %cst {dimension_numbers = #tpu.dot_dimension_numbers<[1], [0], [0], [1], [0, 0, 1, 1], [], []>} : vector<16x32xbf16>, vector<32x96xbf16>, vector<16x96xf32> -> vector<16x96xf32>
    %5 = vector.extract_strided_slice %4 {offsets = [0, 0], sizes = [16, 16], strides = [1, 1]} : vector<16x96xf32> to vector<16x16xf32>
    %6 = vector.broadcast %0 : f32 to vector<16x16xf32>
    %7 = arith.mulf %5, %6 : vector<16x16xf32>
    %8 = arith.truncf %7 : vector<16x16xf32> to vector<16x16xbf16>
    %c0_6 = arith.constant 0 : index
    %c0_7 = arith.constant 0 : index
    %c0_8 = arith.constant 0 : index
    %9 = vector.load %arg8[%c0_6, %c0_7, %c0_8] : memref<6x16x16xbf16, #tpu.memory_space<vmem>>, vector<1x16x16xbf16>
    %10 = vector.shape_cast %9 : vector<1x16x16xbf16> to vector<16x16xbf16>
    %11 = vector.shape_cast %8 : vector<16x16xbf16> to vector<1x16x16xbf16>
    tpu.vector_store %arg8[%c0_6, %c0_7, %c0_8], %11 {strides = array<i32>} : memref<6x16x16xbf16, #tpu.memory_space<vmem>>, vector<1x16x16xbf16>,
    %12 = vector.extract_strided_slice %4 {offsets = [0, 16], sizes = [16, 16], strides = [1, 1]} : vector<16x96xf32> to vector<16x16xf32>
    %13 = vector.broadcast %0 : f32 to vector<16x16xf32>
    %14 = arith.mulf %12, %13 : vector<16x16xf32>
    %15 = arith.truncf %14 : vector<16x16xf32> to vector<16x16xbf16>
    %c1 = arith.constant 1 : index
    %c0_9 = arith.constant 0 : index
    %c0_10 = arith.constant 0 : index
    %16 = vector.load %arg8[%c1, %c0_9, %c0_10] : memref<6x16x16xbf16, #tpu.memory_space<vmem>>, vector<1x16x16xbf16>
    %17 = vector.shape_cast %16 : vector<1x16x16xbf16> to vector<16x16xbf16>
    %18 = vector.shape_cast %15 : vector<16x16xbf16> to vector<1x16x16xbf16>
    tpu.vector_store %arg8[%c1, %c0_9, %c0_10], %18 {strides = array<i32>} : memref<6x16x16xbf16, #tpu.memory_space<vmem>>, vector<1x16x16xbf16>,
    %19 = vector.extract_strided_slice %4 {offsets = [0, 32], sizes = [16, 16], strides = [1, 1]} : vector<16x96xf32> to vector<16x16xf32>
    %20 = arith.truncf %19 : vector<16x16xf32> to vector<16x16xbf16>
    %c2 = arith.constant 2 : index
    %c0_11 = arith.constant 0 : index
    %c0_12 = arith.constant 0 : index
    %21 = vector.load %arg8[%c2, %c0_11, %c0_12] : memref<6x16x16xbf16, #tpu.memory_space<vmem>>, vector<1x16x16xbf16>
    %22 = vector.shape_cast %21 : vector<1x16x16xbf16> to vector<16x16xbf16>
    %23 = vector.shape_cast %20 : vector<16x16xbf16> to vector<1x16x16xbf16>
    tpu.vector_store %arg8[%c2, %c0_11, %c0_12], %23 {strides = array<i32>} : memref<6x16x16xbf16, #tpu.memory_space<vmem>>, vector<1x16x16xbf16>,
    %24 = vector.extract_strided_slice %4 {offsets = [0, 48], sizes = [16, 16], strides = [1, 1]} : vector<16x96xf32> to vector<16x16xf32>
    %25 = arith.truncf %24 : vector<16x16xf32> to vector<16x16xbf16>
    %c3 = arith.constant 3 : index
    %c0_13 = arith.constant 0 : index
    %c0_14 = arith.constant 0 : index
    %26 = vector.load %arg8[%c3, %c0_13, %c0_14] : memref<6x16x16xbf16, #tpu.memory_space<vmem>>, vector<1x16x16xbf16>
    %27 = vector.shape_cast %26 : vector<1x16x16xbf16> to vector<16x16xbf16>
    %28 = vector.shape_cast %25 : vector<16x16xbf16> to vector<1x16x16xbf16>
    tpu.vector_store %arg8[%c3, %c0_13, %c0_14], %28 {strides = array<i32>} : memref<6x16x16xbf16, #tpu.memory_space<vmem>>, vector<1x16x16xbf16>,
    %29 = vector.extract_strided_slice %4 {offsets = [0, 64], sizes = [16, 16], strides = [1, 1]} : vector<16x96xf32> to vector<16x16xf32>
    %30 = arith.truncf %29 : vector<16x16xf32> to vector<16x16xbf16>
    %c4 = arith.constant 4 : index
    %c0_15 = arith.constant 0 : index
    %c0_16 = arith.constant 0 : index
    %31 = vector.load %arg8[%c4, %c0_15, %c0_16] : memref<6x16x16xbf16, #tpu.memory_space<vmem>>, vector<1x16x16xbf16>
    %32 = vector.shape_cast %31 : vector<1x16x16xbf16> to vector<16x16xbf16>
    %33 = vector.shape_cast %30 : vector<16x16xbf16> to vector<1x16x16xbf16>
    tpu.vector_store %arg8[%c4, %c0_15, %c0_16], %33 {strides = array<i32>} : memref<6x16x16xbf16, #tpu.memory_space<vmem>>, vector<1x16x16xbf16>,
    %34 = vector.extract_strided_slice %4 {offsets = [0, 80], sizes = [16, 16], strides = [1, 1]} : vector<16x96xf32> to vector<16x16xf32>
    %35 = arith.truncf %34 : vector<16x16xf32> to vector<16x16xbf16>
    %c5 = arith.constant 5 : index
    %c0_17 = arith.constant 0 : index
    %c0_18 = arith.constant 0 : index
    %36 = vector.load %arg8[%c5, %c0_17, %c0_18] : memref<6x16x16xbf16, #tpu.memory_space<vmem>>, vector<1x16x16xbf16>
    %37 = vector.shape_cast %36 : vector<1x16x16xbf16> to vector<16x16xbf16>
    %38 = vector.shape_cast %35 : vector<16x16xbf16> to vector<1x16x16xbf16>
    tpu.vector_store %arg8[%c5, %c0_17, %c0_18], %38 {strides = array<i32>} : memref<6x16x16xbf16, #tpu.memory_space<vmem>>, vector<1x16x16xbf16>,
    %c0_19 = arith.constant 0 : index
    %c0_20 = arith.constant 0 : index
    %39 = vector.load %arg6[%c0_19, %c0_20] : memref<8x8xf32, #tpu.memory_space<vmem>>, vector<8x8xf32>
    %c0_i32 = arith.constant 0 : i32
    %c2_i32 = arith.constant 2 : i32
    %40 = arith.addi %c0_i32, %c2_i32 : i32
    %c1_i32 = arith.constant 1 : i32
    scf.for %arg10 = %c0_i32 to %40 step %c1_i32  : i32 {
      %53 = arith.index_cast %arg10 : i32 to index
      %c0_36 = arith.constant 0 : index
      %c0_37 = arith.constant 0 : index
      %54 = vector.load %arg8[%53, %c0_36, %c0_37] : memref<6x16x16xbf16, #tpu.memory_space<vmem>>, vector<1x16x16xbf16>
      %55 = vector.shape_cast %54 : vector<1x16x16xbf16> to vector<16x16xbf16>
      %56 = vector.shape_cast %55 : vector<16x16xbf16> to vector<2x8x16xbf16>
      %c2_i32_38 = arith.constant 2 : i32
      %57 = arith.addi %c2_i32_38, %arg10 : i32
      %58 = arith.index_cast %57 : i32 to index
      %c0_39 = arith.constant 0 : index
      %c0_40 = arith.constant 0 : index
      %59 = vector.load %arg8[%58, %c0_39, %c0_40] : memref<6x16x16xbf16, #tpu.memory_space<vmem>>, vector<1x16x16xbf16>
      %60 = vector.shape_cast %59 : vector<1x16x16xbf16> to vector<16x16xbf16>
      %61 = vector.shape_cast %60 : vector<16x16xbf16> to vector<2x8x16xbf16>
      %c4_i32 = arith.constant 4 : i32
      %62 = arith.addi %c4_i32, %arg10 : i32
      %63 = arith.index_cast %62 : i32 to index
      %c0_41 = arith.constant 0 : index
      %c0_42 = arith.constant 0 : index
      %64 = vector.load %arg8[%63, %c0_41, %c0_42] : memref<6x16x16xbf16, #tpu.memory_space<vmem>>, vector<1x16x16xbf16>
      %65 = vector.shape_cast %64 : vector<1x16x16xbf16> to vector<16x16xbf16>
      %66 = vector.shape_cast %65 : vector<16x16xbf16> to vector<2x8x16xbf16>
      "tpu.trace_start"() <{level = 10 : i32, message = "bnd,bmd->bnm"}> : () -> ()
      %cst_43 = arith.constant dense<0.000000e+00> : vector<2x8x8xf32>
      %67 = tpu.matmul %56, %61, %cst_43 {dimension_numbers = #tpu.dot_dimension_numbers<[2], [2], [1], [1], [0, 0, 0, 1, 1, 1], [0], [0]>} : vector<2x8x16xbf16>, vector<2x8x16xbf16>, vector<2x8x8xf32> -> vector<2x8x8xf32>
      "tpu.trace_stop"() : () -> ()
      %68 = vector.shape_cast %39 : vector<8x8xf32> to vector<1x8x8xf32>
      %69 = vector.broadcast %68 : vector<1x8x8xf32> to vector<2x8x8xf32>
      %70 = arith.addf %67, %69 : vector<2x8x8xf32>
      %cst_44 = arith.constant dense<0xFF800000> : vector<2x8xf32>
      %71 = vector.multi_reduction <maximumf>, %70, %cst_44 [2] : vector<2x8x8xf32> to vector<2x8xf32>
      %72 = vector.shape_cast %71 : vector<2x8xf32> to vector<2x8x1xf32>
      %73 = vector.broadcast %72 : vector<2x8x1xf32> to vector<2x8x8xf32>
      %74 = arith.subf %70, %73 : vector<2x8x8xf32>
      %75 = math.exp %74 : vector<2x8x8xf32>
      %cst_45 = arith.constant dense<0.000000e+00> : vector<2x8xf32>
      %76 = vector.multi_reduction <add>, %75, %cst_45 [2] : vector<2x8x8xf32> to vector<2x8xf32>
      %77 = vector.shape_cast %76 : vector<2x8xf32> to vector<2x8x1xf32>
      %78 = tpu.reciprocal %77 {approx = true} : vector<2x8x1xf32> -> vector<2x8x1xf32>
      %79 = vector.broadcast %78 : vector<2x8x1xf32> to vector<2x8x8xf32>
      %80 = arith.mulf %75, %79 : vector<2x8x8xf32>
      %81 = arith.truncf %80 : vector<2x8x8xf32> to vector<2x8x8xbf16>
      "tpu.trace_start"() <{level = 10 : i32, message = "bnm,bmd->bnd"}> : () -> ()
      %cst_46 = arith.constant dense<0.000000e+00> : vector<2x8x16xf32>
      %82 = tpu.matmul %81, %66, %cst_46 {dimension_numbers = #tpu.dot_dimension_numbers<[2], [1], [1], [2], [0, 0, 0, 1, 1, 2], [0], [0]>} : vector<2x8x8xbf16>, vector<2x8x16xbf16>, vector<2x8x16xf32> -> vector<2x8x16xf32>
      "tpu.trace_stop"() : () -> ()
      %83 = vector.shape_cast %82 : vector<2x8x16xf32> to vector<16x16xf32>
      %84 = arith.truncf %83 : vector<16x16xf32> to vector<16x16xbf16>
      %85 = arith.index_cast %arg10 : i32 to index
      %c0_47 = arith.constant 0 : index
      %c0_48 = arith.constant 0 : index
      %86 = vector.load %arg9[%85, %c0_47, %c0_48] : memref<2x16x16xbf16, #tpu.memory_space<vmem>>, vector<1x16x16xbf16>
      %87 = vector.shape_cast %86 : vector<1x16x16xbf16> to vector<16x16xbf16>
      %88 = vector.shape_cast %84 : vector<16x16xbf16> to vector<1x16x16xbf16>
      tpu.vector_store %arg9[%85, %c0_47, %c0_48], %88 {strides = array<i32>} : memref<2x16x16xbf16, #tpu.memory_space<vmem>>, vector<1x16x16xbf16>,
    }
    %c2_i32_21 = arith.constant 2 : i32
    %c0_22 = arith.constant 0 : index
    %c0_23 = arith.constant 0 : index
    %c0_24 = arith.constant 0 : index
    %41 = vector.load %arg9[%c0_22, %c0_23, %c0_24] : memref<2x16x16xbf16, #tpu.memory_space<vmem>>, vector<1x16x16xbf16>
    %42 = vector.shape_cast %41 : vector<1x16x16xbf16> to vector<16x16xbf16>
    %c1_25 = arith.constant 1 : index
    %c0_26 = arith.constant 0 : index
    %c0_27 = arith.constant 0 : index
    %43 = vector.load %arg9[%c1_25, %c0_26, %c0_27] : memref<2x16x16xbf16, #tpu.memory_space<vmem>>, vector<1x16x16xbf16>
    %44 = vector.shape_cast %43 : vector<1x16x16xbf16> to vector<16x16xbf16>
    %45 = tpu.concatenate %42, %44 in 1 : vector<16x16xbf16>, vector<16x16xbf16> -> vector<16x32xbf16>
    %c0_28 = arith.constant 0 : index
    %c0_29 = arith.constant 0 : index
    %46 = vector.load %arg4[%c0_28, %c0_29] : memref<32x32xbf16, #tpu.memory_space<vmem>>, vector<32x32xbf16>
    %cst_30 = arith.constant dense<0.000000e+00> : vector<16x32xf32>
    %47 = tpu.matmul %45, %46, %cst_30 {dimension_numbers = #tpu.dot_dimension_numbers<[1], [0], [0], [1], [0, 0, 1, 1], [], []>} : vector<16x32xbf16>, vector<32x32xbf16>, vector<16x32xf32> -> vector<16x32xf32>
    %c0_31 = arith.constant 0 : index
    %c0_32 = arith.constant 0 : index
    %48 = vector.load %arg5[%c0_31, %c0_32] : memref<1x32xf32, #tpu.memory_space<vmem>>, vector<1x32xf32>
    %49 = vector.broadcast %48 : vector<1x32xf32> to vector<16x32xf32>
    %50 = arith.addf %47, %49 : vector<16x32xf32>
    %51 = vector.shape_cast %50 : vector<16x32xf32> to vector<2x8x32xf32>
    %c0_33 = arith.constant 0 : index
    %c0_34 = arith.constant 0 : index
    %c0_35 = arith.constant 0 : index
    %52 = vector.load %arg7[%c0_33, %c0_34, %c0_35] : memref<2x8x32xf32, #tpu.memory_space<vmem>>, vector<2x8x32xf32>
    tpu.vector_store %arg7[%c0_33, %c0_34, %c0_35], %51 {strides = array<i32>} : memref<2x8x32xf32, #tpu.memory_space<vmem>>, vector<2x8x32xf32>,
    return
  }
  func.func @transform_0(%arg0: i32) -> (i32, i32) {
    %c0_i32 = arith.constant 0 : i32
    %c0_i32_0 = arith.constant 0 : i32
    %c0_i32_1 = arith.constant 0 : i32
    return %c0_i32, %c0_i32_0 : i32, i32
  }
  func.func @transform_1(%arg0: i32) -> (i32, i32, i32) {
    %c0_i32 = arith.constant 0 : i32
    %c0_i32_0 = arith.constant 0 : i32
    %c0_i32_1 = arith.constant 0 : i32
    return %arg0, %c0_i32, %c0_i32_0 : i32, i32, i32
  }
  func.func @transform_2(%arg0: i32) -> (i32, i32) {
    %c0_i32 = arith.constant 0 : i32
    %c0_i32_0 = arith.constant 0 : i32
    %c0_i32_1 = arith.constant 0 : i32
    return %c0_i32, %c0_i32_0 : i32, i32
  }
  func.func @transform_3(%arg0: i32) -> (i32, i32) {
    %c0_i32 = arith.constant 0 : i32
    %c0_i32_0 = arith.constant 0 : i32
    %c0_i32_1 = arith.constant 0 : i32
    return %c0_i32, %c0_i32_0 : i32, i32
  }
  func.func @transform_4(%arg0: i32) -> (i32, i32) {
    %c0_i32 = arith.constant 0 : i32
    %c0_i32_0 = arith.constant 0 : i32
    %c0_i32_1 = arith.constant 0 : i32
    return %c0_i32, %c0_i32_0 : i32, i32
  }
  func.func @transform_5(%arg0: i32) -> (i32, i32) {
    %c0_i32 = arith.constant 0 : i32
    %c0_i32_0 = arith.constant 0 : i32
    %c0_i32_1 = arith.constant 0 : i32
    return %c0_i32, %c0_i32_0 : i32, i32
  }
  func.func @transform_6(%arg0: i32) -> (i32, i32, i32) {
    %c0_i32 = arith.constant 0 : i32
    %c0_i32_0 = arith.constant 0 : i32
    %c0_i32_1 = arith.constant 0 : i32
    return %arg0, %c0_i32, %c0_i32_0 : i32, i32, i32
  }
}

</mosaic_0001>

<llo_original>
// kernel: tpu_custom_call.1
$region0: #{tpu_custom_call.1}
  #allocation0 [shape = 'u32[]', space=smem, size = 0x4, offset = 0x4, fixed_abs, tag = 'smem constant byte address 0x4 - core index']
  #allocation1 [shape = 'u32[144,128]{1,0:T(1,128)}', space=vmem, size = 0x12000, scoped, tag = 'internal scratch']
  #allocation2 [shape = 'bf16[6,16,16]{2,1,0:T(8,128)(2,1)}', space=vmem, size = 0x6000, scoped, tag = 'scratch operand']
  #allocation3 [shape = 'bf16[2,16,16]{2,1,0:T(8,128)(2,1)}', space=vmem, size = 0x2000, scoped, tag = 'scratch operand']
  #allocation4 [shape = 'f32[1,1]{1,0:T(1,128)S(6)}', space=smem, size = 0x200, scoped, tag = 'scoped memory for tpu_custom_call.1']
  %s0 = inlined_call_operand.<no memory space> [shape: f32[1,1], index: 0, kind: input, shape index: {}]
  %s1 = inlined_call_operand.hbm [shape: bf16[4,8,32], index: 1, kind: input, shape index: {}]
  %s2 = inlined_call_operand.hbm [shape: bf16[32,96], index: 2, kind: input, shape index: {}]
  %s3 = inlined_call_operand.hbm [shape: bf16[32,32], index: 3, kind: input, shape index: {}]
  %s4 = inlined_call_operand.vmem [shape: f32[1,32], index: 4, kind: input, shape index: {}]
  %s5 = inlined_call_operand.vmem [shape: f32[8,8], index: 5, kind: input, shape index: {}]
  %s6 = inlined_call_operand.hbm [shape: f32[4,8,32], index: 6, kind: output, shape index: {}]
  %s7 = sld [smem:[#allocation0]]
  $region76: #{tpu_custom_call.1} parent=0
    _
  %s9 = ssub.s32 1, %s7
  %s10 = scalar_select 0, %s9, %s7
  %11 = sst [smem:[#allocation4]] %s0
  $region1: #{tpu_custom_call.1} parent=0
    #allocation5 [shape = 'u8[8192]{0}', space=vmem, size = 0x2000, scoped, tag = 'input window, operand 1']
    #allocation6 [shape = 's32[2]{0}', space=sflag, size = 0x8, scoped, tag = 'scoped memory for tpu_custom_call.1']
    #allocation7 [shape = 's32[2]{0}', space=sflag, size = 0x8, scoped, tag = 'scoped memory for tpu_custom_call.1']
    #allocation8 [shape = 'u8[8192]{0}', space=vmem, size = 0x2000, scoped, tag = 'input window, operand 2, single buffered']
    #allocation9 [shape = 's32[1]{0}', space=sflag, size = 0x4, scoped, tag = 'scoped memory for tpu_custom_call.1']
    #allocation10 [shape = 'u8[8192]{0}', space=vmem, size = 0x2000, scoped, tag = 'input window, operand 3, single buffered']
    #allocation11 [shape = 'u8[16384]{0}', space=vmem, size = 0x4000, scoped, tag = 'output window, operand 0']
    %12 = vsyncpa [#allocation6], 0
    %s13 = scalar_lea.sflag [#allocation6], 1
    %14 = vsyncpa %s13, 0
    %15 = vsyncpa [#allocation9], 0
    %16 = vsyncpa [#allocation7], 0
    %s17 = scalar_lea.sflag [#allocation7], 1
    %18 = vsyncpa %s17, 0
    loop: start=0, step=1, limit=4
    $region2: #{tpu_custom_call.1} parent=1 // loop_pre_header
      _
    $region3: #{tpu_custom_call.1} parent=1 // loop_header
      %s20 = sphi 0, %s24
      %p21 = scmp.ge.s32.totalorder %s20, 4
      %s28 = sphi 0, %s28
      %s30 = sphi 0, %s28
      %s31 = sphi 0, %s30
      %s45 = sphi 0, %s31
      %s51 = sphi 0, %s53
      %s54 = sphi 0, %s51
      %s55 = sphi 0, %s54
      %s71 = sphi 0, %s55
      %s75 = sphi 0, %s75
      %s77 = sphi 0, %s75
      %s78 = sphi 0, %s77
      %s92 = sphi 0, %s78
      %s96 = sphi 0, %s96
      %s98 = sphi 0, %s96
      %s99 = sphi 0, %s98
      %s113 = sphi 0, %s99
      %s117 = sphi 0, %s117
      %s119 = sphi 0, %s117
      %s120 = sphi 0, %s119
      %s134 = sphi 0, %s120
      %s138 = sphi 0, %s138
      %s140 = sphi 0, %s138
      %s141 = sphi 0, %s140
      %s155 = sphi 0, %s141
      %s161 = sphi 0, %s163
      %s164 = sphi 0, %s161
      %s165 = sphi 0, %s164
      %s181 = sphi 0, %s165
    $region4: #{tpu_custom_call.1} parent=1 // loop_header_branch
      %23 = sbr.rel (%p21) target = $region8
    $region5: #{tpu_custom_call.1} parent=1 // loop_body
      %s25 = ssub.s32 %s20, 1
      %s26 = ssub.s32 %s20, 2
      %s27 = sadd.s32 %s20, 1
      %s29 = sadd.s32 %s28, 1
      %p32 = scmp.eq.s32.totalorder %s20, 1
      %p33 = scmp.ne.s32.totalorder %s28, %s30
      %p34 = scmp.eq.s32.totalorder %s20, 0
      %p35 = por %p33, %p34
      %p36 = scmp.ne.s32.totalorder %s28, %s30
      %p37 = scmp.eq.s32.totalorder %s25, 1
      %p38 = por %p36, %p37
      %p39 = scmp.ne.s32.totalorder %s30, %s31
      %p40 = scmp.eq.s32.totalorder %s25, 0
      %p41 = por %p39, %p40
      %p42 = scmp.ne.s32.totalorder %s30, %s31
      %p43 = scmp.eq.s32.totalorder %s26, 1
      %p44 = por %p42, %p43
      %p46 = scmp.ne.s32.totalorder %s31, %s45
      %p47 = scmp.eq.s32.totalorder %s26, 0
      %p48 = por %p46, %p47
      %s49 = ssub.s32 %s20, %s27
      %p50 = scmp.eq.s32.totalorder %s49, 0
      %s52 = sadd.s32 %s51, 1
      %s53 = scalar_select %p50, %s51, %s52
      %p56 = pneg %p50
      %p57 = scmp.eq.s32.totalorder %s20, 1
      %p58 = por %p56, %p57
      %p59 = scmp.ne.s32.totalorder %s51, %s54
      %p60 = scmp.eq.s32.totalorder %s20, 0
      %p61 = por %p59, %p60
      %p62 = scmp.ne.s32.totalorder %s51, %s54
      %p63 = scmp.eq.s32.totalorder %s25, 1
      %p64 = por %p62, %p63
      %p65 = scmp.ne.s32.totalorder %s54, %s55
      %p66 = scmp.eq.s32.totalorder %s25, 0
      %p67 = por %p65, %p66
      %p68 = scmp.ne.s32.totalorder %s54, %s55
      %p69 = scmp.eq.s32.totalorder %s26, 1
      %p70 = por %p68, %p69
      %p72 = scmp.ne.s32.totalorder %s55, %s71
      %p73 = scmp.eq.s32.totalorder %s26, 0
      %p74 = por %p72, %p73
      %s76 = sadd.s32 %s75, 1
      %p79 = scmp.eq.s32.totalorder %s20, 1
      %p80 = scmp.ne.s32.totalorder %s75, %s77
      %p81 = scmp.eq.s32.totalorder %s20, 0
      %p82 = por %p80, %p81
      %p83 = scmp.ne.s32.totalorder %s75, %s77
      %p84 = scmp.eq.s32.totalorder %s25, 1
      %p85 = por %p83, %p84
      %p86 = scmp.ne.s32.totalorder %s77, %s78
      %p87 = scmp.eq.s32.totalorder %s25, 0
      %p88 = por %p86, %p87
      %p89 = scmp.ne.s32.totalorder %s77, %s78
      %p90 = scmp.eq.s32.totalorder %s26, 1
      %p91 = por %p89, %p90
      %p93 = scmp.ne.s32.totalorder %s78, %s92
      %p94 = scmp.eq.s32.totalorder %s26, 0
      %p95 = por %p93, %p94
      %s97 = sadd.s32 %s96, 1
      %p100 = scmp.eq.s32.totalorder %s20, 1
      %p101 = scmp.ne.s32.totalorder %s96, %s98
      %p102 = scmp.eq.s32.totalorder %s20, 0
      %p103 = por %p101, %p102
      %p104 = scmp.ne.s32.totalorder %s96, %s98
      %p105 = scmp.eq.s32.totalorder %s25, 1
      %p106 = por %p104, %p105
      %p107 = scmp.ne.s32.totalorder %s98, %s99
      %p108 = scmp.eq.s32.totalorder %s25, 0
      %p109 = por %p107, %p108
      %p110 = scmp.ne.s32.totalorder %s98, %s99
      %p111 = scmp.eq.s32.totalorder %s26, 1
      %p112 = por %p110, %p111
      %p114 = scmp.ne.s32.totalorder %s99, %s113
      %p115 = scmp.eq.s32.totalorder %s26, 0
      %p116 = por %p114, %p115
      %s118 = sadd.s32 %s117, 1
      %p121 = scmp.eq.s32.totalorder %s20, 1
      %p122 = scmp.ne.s32.totalorder %s117, %s119
      %p123 = scmp.eq.s32.totalorder %s20, 0
      %p124 = por %p122, %p123
      %p125 = scmp.ne.s32.totalorder %s117, %s119
      %p126 = scmp.eq.s32.totalorder %s25, 1
      %p127 = por %p125, %p126
      %p128 = scmp.ne.s32.totalorder %s119, %s120
      %p129 = scmp.eq.s32.totalorder %s25, 0
      %p130 = por %p128, %p129
      %p131 = scmp.ne.s32.totalorder %s119, %s120
      %p132 = scmp.eq.s32.totalorder %s26, 1
      %p133 = por %p131, %p132
      %p135 = scmp.ne.s32.totalorder %s120, %s134
      %p136 = scmp.eq.s32.totalorder %s26, 0
      %p137 = por %p135, %p136
      %s139 = sadd.s32 %s138, 1
      %p142 = scmp.eq.s32.totalorder %s20, 1
      %p143 = scmp.ne.s32.totalorder %s138, %s140
      %p144 = scmp.eq.s32.totalorder %s20, 0
      %p145 = por %p143, %p144
      %p146 = scmp.ne.s32.totalorder %s138, %s140
      %p147 = scmp.eq.s32.totalorder %s25, 1
      %p148 = por %p146, %p147
      %p149 = scmp.ne.s32.totalorder %s140, %s141
      %p150 = scmp.eq.s32.totalorder %s25, 0
      %p151 = por %p149, %p150
      %p152 = scmp.ne.s32.totalorder %s140, %s141
      %p153 = scmp.eq.s32.totalorder %s26, 1
      %p154 = por %p152, %p153
      %p156 = scmp.ne.s32.totalorder %s141, %s155
      %p157 = scmp.eq.s32.totalorder %s26, 0
      %p158 = por %p156, %p157
      %s159 = ssub.s32 %s20, %s27
      %p160 = scmp.eq.s32.totalorder %s159, 0
      %s162 = sadd.s32 %s161, 1
      %s163 = scalar_select %p160, %s161, %s162
      %p166 = pneg %p160
      %p167 = scmp.eq.s32.totalorder %s20, 1
      %p168 = por %p166, %p167
      %p169 = scmp.ne.s32.totalorder %s161, %s164
      %p170 = scmp.eq.s32.totalorder %s20, 0
      %p171 = por %p169, %p170
      %p172 = scmp.ne.s32.totalorder %s161, %s164
      %p173 = scmp.eq.s32.totalorder %s25, 1
      %p174 = por %p172, %p173
      %p175 = scmp.ne.s32.totalorder %s164, %s165
      %p176 = scmp.eq.s32.totalorder %s25, 0
      %p177 = por %p175, %p176
      %p178 = scmp.ne.s32.totalorder %s164, %s165
      %p179 = scmp.eq.s32.totalorder %s26, 1
      %p180 = por %p178, %p179
      %p182 = scmp.ne.s32.totalorder %s165, %s181
      %p183 = scmp.eq.s32.totalorder %s26, 0
      %p184 = por %p182, %p183
      %p185 = scmp.le.s32.totalorder 1, %s20
      %p186 = scmp.lt.s32.totalorder %s20, 3
      %p187 = pnand %p185, %p186
      %p188 = pneg %p187
      // Predicated region
      $region9: #{tpu_custom_call.1} parent=5 // pred_check
        _
      $region10: #{tpu_custom_call.1} parent=5 // pred_check_branch
        %190 = sbr.rel (%p187) target = $region12
      $region11: #{tpu_custom_call.1} parent=5 // pred_region
        %s191 = ssub.s32 %s20, 1
        // Predicated region
        $region13: #{tpu_custom_call.1} parent=11 // pred_check
          %p192 = pneg %p41
        $region14: #{tpu_custom_call.1} parent=11 // pred_check_branch
          %194 = sbr.rel (%p192) target = $region16
        $region15: #{tpu_custom_call.1} parent=11 // pred_region
          _
        $region16: #{tpu_custom_call.1} parent=11 // pred_fallthru
          _
        // Predicated region
        $region17: #{tpu_custom_call.1} parent=11 // pred_check
          %p195 = pneg %p88
        $region18: #{tpu_custom_call.1} parent=11 // pred_check_branch
          %197 = sbr.rel (%p195) target = $region20
        $region19: #{tpu_custom_call.1} parent=11 // pred_region
          %s199 = ssub.s32 256, 256
          %200 = vsyncadd [#allocation9], %s199
          %s201 = sshll.u32 [#allocation8], 4
          %s202 = int_to_ptr.vmem [resolvable:$true] %s201
          %207 = dma.hbm_to_vmem [thread:$0]  %s2, 256, %s202, [#allocation9], 64, 64, 4
        $region20: #{tpu_custom_call.1} parent=11 // pred_fallthru
          _
        // Predicated region
        $region21: #{tpu_custom_call.1} parent=11 // pred_check
          %p208 = pneg %p109
        $region22: #{tpu_custom_call.1} parent=11 // pred_check_branch
          %210 = sbr.rel (%p208) target = $region24
        $region23: #{tpu_custom_call.1} parent=11 // pred_region
          %s212 = ssub.s32 256, 256
          %213 = vsyncadd [#allocation9], %s212
          %s214 = sshll.u32 [#allocation10], 4
          %s215 = int_to_ptr.vmem [resolvable:$true] %s214
          %220 = dma.hbm_to_vmem [thread:$0]  %s3, 256, %s215, [#allocation9], 64, 64, 4
        $region24: #{tpu_custom_call.1} parent=11 // pred_fallthru
          _
        // Predicated region
        $region25: #{tpu_custom_call.1} parent=11 // pred_check
          %p221 = pneg %p130
        $region26: #{tpu_custom_call.1} parent=11 // pred_check_branch
          %223 = sbr.rel (%p221) target = $region28
        $region27: #{tpu_custom_call.1} parent=11 // pred_region
          _
        $region28: #{tpu_custom_call.1} parent=11 // pred_fallthru
          _
        // Predicated region
        $region29: #{tpu_custom_call.1} parent=11 // pred_check
          %p224 = pneg %p151
        $region30: #{tpu_custom_call.1} parent=11 // pred_check_branch
          %226 = sbr.rel (%p224) target = $region32
        $region31: #{tpu_custom_call.1} parent=11 // pred_region
          _
        $region32: #{tpu_custom_call.1} parent=11 // pred_fallthru
          _
      $region12: #{tpu_custom_call.1} parent=5 // pred_fallthru
        _
      %p227 = scmp.lt.s32.totalorder %s20, 2
      // Predicated region
      $region33: #{tpu_custom_call.1} parent=5 // pred_check
        %p228 = pneg %p227
      $region34: #{tpu_custom_call.1} parent=5 // pred_check_branch
        %230 = sbr.rel (%p228) target = $region36
      $region35: #{tpu_custom_call.1} parent=5 // pred_region
        // Predicated region
        $region37: #{tpu_custom_call.1} parent=35 // pred_check
          %p231 = pneg %p61
        $region38: #{tpu_custom_call.1} parent=35 // pred_check_branch
          %233 = sbr.rel (%p231) target = $region40
        $region39: #{tpu_custom_call.1} parent=35 // pred_region
          %s234 = sand.u32 %s51, 1
          %s235 = scalar_lea.sflag [#allocation6], %s234
          %s236 = sand.u32 %s51, 1
          %s237 = smul.addr %s236, 8
          %s238 = scalar_lea.vmem [#allocation5], %s237
          %s239 = smul.u32 2, %s20
          %s241 = ssub.s32 128, 128
          %242 = vsyncadd %s235, %s241
          %s243 = smul.addr %s239, 64
          %s244 = scalar_lea.hbm %s1, %s243
          %s245 = sshll.u32 %s238, 4
          %s246 = int_to_ptr.vmem [resolvable:$true] %s245
          %251 = dma.hbm_to_vmem [thread:$0]  %s244, 128, %s246, %s235, 64, 64, 4
        $region40: #{tpu_custom_call.1} parent=35 // pred_fallthru
          _
      $region36: #{tpu_custom_call.1} parent=5 // pred_fallthru
        _
      %p252 = scmp.le.s32.totalorder 1, %s20
      %p253 = scmp.lt.s32.totalorder %s20, 3
      %p254 = pnand %p252, %p253
      %p255 = pneg %p254
      // Predicated region
      $region41: #{tpu_custom_call.1} parent=5 // pred_check
        _
      $region42: #{tpu_custom_call.1} parent=5 // pred_check_branch
        %257 = sbr.rel (%p254) target = $region44
      $region43: #{tpu_custom_call.1} parent=5 // pred_region
        %s258 = ssub.s32 %s20, 1
        %s259 = sand.u32 %s54, 1
        %s260 = scalar_lea.sflag [#allocation6], %s259
        %s261 = sand.u32 %s54, 1
        %s262 = smul.addr %s261, 8
        %s263 = scalar_lea.vmem [#allocation5], %s262
        // Predicated region
        $region45: #{tpu_custom_call.1} parent=43 // pred_check
          %p264 = pneg %p67
        $region46: #{tpu_custom_call.1} parent=43 // pred_check_branch
          %266 = sbr.rel (%p264) target = $region48
        $region47: #{tpu_custom_call.1} parent=43 // pred_region
          %267 = dma.done %s260, 128
        $region48: #{tpu_custom_call.1} parent=43 // pred_fallthru
          _
        // Predicated region
        $region49: #{tpu_custom_call.1} parent=43 // pred_check
          %p268 = pneg %p88
        $region50: #{tpu_custom_call.1} parent=43 // pred_check_branch
          %270 = sbr.rel (%p268) target = $region52
        $region51: #{tpu_custom_call.1} parent=43 // pred_region
          %271 = dma.done [#allocation9], 256
        $region52: #{tpu_custom_call.1} parent=43 // pred_fallthru
          _
        // Predicated region
        $region53: #{tpu_custom_call.1} parent=43 // pred_check
          %p272 = pneg %p109
        $region54: #{tpu_custom_call.1} parent=43 // pred_check_branch
          %274 = sbr.rel (%p272) target = $region56
        $region55: #{tpu_custom_call.1} parent=43 // pred_region
          %275 = dma.done [#allocation9], 256
        $region56: #{tpu_custom_call.1} parent=43 // pred_fallthru
          _
        %p276 = pneg %p41
        %p277 = pneg %p38
        %s278 = sand.u32 %s54, 1
        %s279 = scalar_lea.sflag [#allocation6], %s278
        %s280 = sand.u32 %s54, 1
        %s281 = smul.addr %s280, 8
        %s282 = scalar_lea.vmem [#allocation5], %s281
        %p283 = pneg %p67
        %p284 = pneg %p64
        %p285 = pneg %p88
        %p286 = pneg %p85
        %p287 = pneg %p109
        %p288 = pneg %p106
        %p289 = pneg %p130
        %p290 = pneg %p127
        %p291 = pneg %p151
        %p292 = pneg %p148
        %p293 = pneg %p177
        %p294 = pneg %p174
        %s295 = sand.u32 %s164, 1
        %s296 = scalar_lea.sflag [#allocation7], %s295
        %s297 = sand.u32 %s164, 1
        %s298 = smul.addr %s297, 16
        %s299 = scalar_lea.vmem [#allocation11], %s298
        %s300 = smul.u32 2, %s25
        %s301 = smul.u32 2, %s25
        %s303 = sld [smem:[#allocation4]]
        %v304 = vld [vmem:[%s263] sm:$0xf]
        %v305 = vld [vmem:[%s263 + $0x4] sm:$0xf]
        %v306 = vld [vmem:[#allocation8] sm:$0xf]
        %v307 = vld [vmem:[#allocation8 + $0x4] sm:$0xf]
        %v308 = vld [vmem:[#allocation8 + $0x8] sm:$0xf]
        %v309 = vld [vmem:[#allocation8 + $0xc] sm:$0xf]
        %v312 = vunpack.c.l.b16 %v304
        %v313 = vunpack.c.l.b16 %v305
        %v314 = vpack.c.b16 %v313, %v312
        %v319 = vunpack.c.l.b16 %v306
        %v320 = vunpack.c.l.b16 %v307
        %v321 = vunpack.c.l.b16 %v308
        %v322 = vunpack.c.l.b16 %v309
        %v323 = vpack.c.b16 %v320, %v319
        %v324 = vpack.c.b16 %v322, %v321
        %vm327 = vcmask 261120
        %v329 = vsel %vm327, %v314, 0
        %331 = vmatprep.subr.bf16.mxu0 0
        %332 = vmatpush1.bf16.msra.mxu0 0
        %333 = vmatprep.subr.bf16.mxu0 0
        %334 = vmatpush1.bf16.msra.mxu0 0
        %335 = vmatprep.subr.bf16.mxu0 0
        %336 = vmatpush1.bf16.msra.mxu0 0
        %337 = vmatprep.subr.bf16.mxu0 0
        %338 = vmatpush1.bf16.msra.mxu0 0
        %339 = vmatprep.subr.bf16.mxu0 0
        %340 = vmatpush1.bf16.msra.mxu0 0
        %341 = vmatprep.subr.bf16.mxu0 0
        %342 = vmatpush1.bf16.msra.mxu0 0
        %343 = vmatprep.subr.bf16.mxu0 0
        %344 = vmatpush1.bf16.msra.mxu0 %v324
        %345 = vmatprep.subr.bf16.mxu0 0
        %346 = vmatpush1.bf16.msra.mxu0 %v323
        %347 = vmatprep.subr.bf16.mxu0 0
        %348 = vmatpush2.bf16.msra.mxu0 0
        %349 = vmatprep.subr.bf16.mxu0 0
        %350 = vmatpush2.bf16.msra.mxu0 0
        %351 = vmatprep.subr.bf16.mxu0 0
        %352 = vmatpush2.bf16.msra.mxu0 0
        %353 = vmatprep.subr.bf16.mxu0 0
        %354 = vmatpush2.bf16.msra.mxu0 0
        %355 = vmatprep.subr.bf16.mxu0 0
        %356 = vmatpush2.bf16.msra.mxu0 0
        %357 = vmatprep.subr.bf16.mxu0 0
        %358 = vmatpush2.bf16.msra.mxu0 0
        %359 = vmatprep.subr.bf16.mxu0 0
        %360 = vmatpush2.bf16.msra.mxu0 0
        %361 = vmatprep.subr.bf16.mxu0 0
        %362 = vmatpush2.bf16.msra.mxu0 0
        %363 = vmatprep.mubr.bf16.mxu0 0
        %364 = vmatmul.mubr.bf16.gmra.mxu0 %v329
        %v365 = vpop.f32.mrf.mxu0
        %v366 = vadd.f32 0.0, %v365
        %v367 = vpop.f32.mrf.mxu0
        %v368 = vpop.f32.mrf.mxu0
        %v369 = vadd.f32 0.0, %v368
        %v370 = vpop.f32.mrf.mxu0
        %371 = vdwg.mxu0
        %v372 = vstv %s303
        %v373 = vmul.f32 %v366, %v372
        %v374 = vmul.f32 %v369, %v372
        %v375 = vpack.c.bf16 %v374, %v373
        %v377 = vunpack.c.l.b16 %v375
        %v378 = vunpack.c.h.b16 %v375
        %v379 = vpack.c.b16 %v377, %v377
        %v380 = vpack.c.b16 %v378, %v378
        %vm383 = vcmask 125952
        %384 = vst.msk [vmem:[#allocation2] sm:$0xf] %vm383, %v379
        %385 = vst.msk [vmem:[#allocation2 + $0x4] sm:$0xf] %vm383, %v380
        %386 = vrot.lane.b32.xlu0 %v379, 112
        %v387 = vpop.permute.xlu0 %386
        %388 = vrot.lane.b32.xlu0 %v380, 112
        %v389 = vpop.permute.xlu0 %388
        %s392 = scalar_lea.vmem [#allocation2], 8
        %393 = vst.msk [vmem:[%s392] sm:$0xf] %vm383, %v387
        %394 = vst.msk [vmem:[%s392 + $0x4] sm:$0xf] %vm383, %v389
        %v395 = vpack.c.bf16 %v369, %v366
        %v397 = vunpack.c.l.b16 %v395
        %v398 = vunpack.c.h.b16 %v395
        %v399 = vpack.c.b16 %v397, %v397
        %v400 = vpack.c.b16 %v398, %v398
        %401 = vrot.lane.b32.xlu0 %v399, 96
        %v402 = vpop.permute.xlu0 %401
        %403 = vrot.lane.b32.xlu0 %v400, 96
        %v404 = vpop.permute.xlu0 %403
        %s407 = scalar_lea.vmem [#allocation2], 16
        %408 = vst.msk [vmem:[%s407] sm:$0xf] %vm383, %v402
        %409 = vst.msk [vmem:[%s407 + $0x4] sm:$0xf] %vm383, %v404
        %410 = vrot.lane.b32.xlu0 %v399, 80
        %v411 = vpop.permute.xlu0 %410
        %412 = vrot.lane.b32.xlu0 %v400, 80
        %v413 = vpop.permute.xlu0 %412
        %s416 = scalar_lea.vmem [#allocation2], 24
        %417 = vst.msk [vmem:[%s416] sm:$0xf] %vm383, %v411
        %418 = vst.msk [vmem:[%s416 + $0x4] sm:$0xf] %vm383, %v413
        %419 = vrot.lane.b32.xlu0 %v399, 64
        %v420 = vpop.permute.xlu0 %419
        %421 = vrot.lane.b32.xlu0 %v400, 64
        %v422 = vpop.permute.xlu0 %421
        %s425 = scalar_lea.vmem [#allocation2], 32
        %426 = vst.msk [vmem:[%s425] sm:$0xf] %vm383, %v420
        %427 = vst.msk [vmem:[%s425 + $0x4] sm:$0xf] %vm383, %v422
        %428 = vrot.lane.b32.xlu0 %v399, 48
        %v429 = vpop.permute.xlu0 %428
        %430 = vrot.lane.b32.xlu0 %v400, 48
        %v431 = vpop.permute.xlu0 %430
        %s434 = scalar_lea.vmem [#allocation2], 40
        %435 = vst.msk [vmem:[%s434] sm:$0xf] %vm383, %v429
        %436 = vst.msk [vmem:[%s434 + $0x4] sm:$0xf] %vm383, %v431
        %v437 = vld [vmem:[%s5] sm:$0xff]
        loop: start=0, step=1, limit=2
        $region57: #{tpu_custom_call.1} parent=43 // loop_pre_header
          _
        $region58: #{tpu_custom_call.1} parent=43 // loop_header
          %s439 = sphi 0, %s443
          %p440 = scmp.ge.s32.totalorder %s439, 2
        $region59: #{tpu_custom_call.1} parent=43 // loop_header_branch
          %442 = sbr.rel (%p440) target = $region63
        $region60: #{tpu_custom_call.1} parent=43 // loop_body
          %s444 = smul.u32 %s439, 2
          %s445 = smul.addr %s444, 4
          %s446 = scalar_lea.vmem [#allocation2], %s445
          %v447 = vld [vmem:[%s446] sm:$0xf]
          %v448 = vld [vmem:[%s446 + $0x4] sm:$0xf]
          %s449 = sadd.s32 %s439, 2
          %s450 = smul.u32 %s449, 2
          %s451 = smul.addr %s450, 4
          %s452 = scalar_lea.vmem [#allocation2], %s451
          %v453 = vld [vmem:[%s452] sm:$0xf]
          %v454 = vld [vmem:[%s452 + $0x4] sm:$0xf]
          %s455 = sadd.s32 %s439, 4
          %s456 = smul.u32 %s455, 2
          %s457 = smul.addr %s456, 4
          %s458 = scalar_lea.vmem [#allocation2], %s457
          %v459 = vld [vmem:[%s458] sm:$0xf]
          %v460 = vld [vmem:[%s458 + $0x4] sm:$0xf]
          %vm461 = vcmask 130048
          %v463 = vsel %vm461, %v447, 0
          %v466 = vsel %vm461, %v453, 0
          %468 = vmatprep.subr.bf16.mxu0 0
          %469 = vmatpush1.bf16.xpose.msra.mxu0 0
          %470 = vmatprep.subr.bf16.mxu0 0
          %471 = vmatpush1.bf16.xpose.msra.mxu0 0
          %472 = vmatprep.subr.bf16.mxu0 0
          %473 = vmatpush1.bf16.xpose.msra.mxu0 0
          %474 = vmatprep.subr.bf16.mxu0 0
          %475 = vmatpush1.bf16.xpose.msra.mxu0 0
          %476 = vmatprep.subr.bf16.mxu0 0
          %477 = vmatpush1.bf16.xpose.msra.mxu0 0
          %478 = vmatprep.subr.bf16.mxu0 0
          %479 = vmatpush1.bf16.xpose.msra.mxu0 0
          %480 = vmatprep.subr.bf16.mxu0 0
          %481 = vmatpush1.bf16.xpose.msra.mxu0 0
          %482 = vmatprep.subr.bf16.mxu0 0
          %483 = vmatpush1.bf16.xpose.msra.mxu0 %v466
          %484 = vmatprep.subr.bf16.mxu0 0
          %485 = vmatpush2.bf16.xpose.msra.mxu0 0
          %486 = vmatprep.subr.bf16.mxu0 0
          %487 = vmatpush2.bf16.xpose.msra.mxu0 0
          %488 = vmatprep.subr.bf16.mxu0 0
          %489 = vmatpush2.bf16.xpose.msra.mxu0 0
          %490 = vmatprep.subr.bf16.mxu0 0
          %491 = vmatpush2.bf16.xpose.msra.mxu0 0
          %492 = vmatprep.subr.bf16.mxu0 0
          %493 = vmatpush2.bf16.xpose.msra.mxu0 0
          %494 = vmatprep.subr.bf16.mxu0 0
          %495 = vmatpush2.bf16.xpose.msra.mxu0 0
          %496 = vmatprep.subr.bf16.mxu0 0
          %497 = vmatpush2.bf16.xpose.msra.mxu0 0
          %498 = vmatprep.subr.bf16.mxu0 0
          %499 = vmatpush2.bf16.xpose.msra.mxu0 0
          %500 = vmatprep.mubr.bf16.mxu0 0
          %501 = vmatmul.mubr.bf16.gmra.mxu0 %v463
          %v502 = vpop.f32.mrf.mxu0
          %v503 = vadd.f32 %v437, %v502
          %v504 = vpop.f32.mrf.mxu0
          %v505 = vpop.f32.mrf.mxu0
          %v506 = vpop.f32.mrf.mxu0
          %507 = vdwg.mxu0
          %v509 = vsel %vm461, %v448, 0
          %v512 = vsel %vm461, %v454, 0
          %514 = vmatprep.subr.bf16.mxu0 0
          %515 = vmatpush1.bf16.xpose.msra.mxu0 0
          %516 = vmatprep.subr.bf16.mxu0 0
          %517 = vmatpush1.bf16.xpose.msra.mxu0 0
          %518 = vmatprep.subr.bf16.mxu0 0
          %519 = vmatpush1.bf16.xpose.msra.mxu0 0
          %520 = vmatprep.subr.bf16.mxu0 0
          %521 = vmatpush1.bf16.xpose.msra.mxu0 0
          %522 = vmatprep.subr.bf16.mxu0 0
          %523 = vmatpush1.bf16.xpose.msra.mxu0 0
          %524 = vmatprep.subr.bf16.mxu0 0
          %525 = vmatpush1.bf16.xpose.msra.mxu0 0
          %526 = vmatprep.subr.bf16.mxu0 0
          %527 = vmatpush1.bf16.xpose.msra.mxu0 0
          %528 = vmatprep.subr.bf16.mxu0 0
          %529 = vmatpush1.bf16.xpose.msra.mxu0 %v512
          %530 = vmatprep.subr.bf16.mxu0 0
          %531 = vmatpush2.bf16.xpose.msra.mxu0 0
          %532 = vmatprep.subr.bf16.mxu0 0
          %533 = vmatpush2.bf16.xpose.msra.mxu0 0
          %534 = vmatprep.subr.bf16.mxu0 0
          %535 = vmatpush2.bf16.xpose.msra.mxu0 0
          %536 = vmatprep.subr.bf16.mxu0 0
          %537 = vmatpush2.bf16.xpose.msra.mxu0 0
          %538 = vmatprep.subr.bf16.mxu0 0
          %539 = vmatpush2.bf16.xpose.msra.mxu0 0
          %540 = vmatprep.subr.bf16.mxu0 0
          %541 = vmatpush2.bf16.xpose.msra.mxu0 0
          %542 = vmatprep.subr.bf16.mxu0 0
          %543 = vmatpush2.bf16.xpose.msra.mxu0 0
          %544 = vmatprep.subr.bf16.mxu0 0
          %545 = vmatpush2.bf16.xpose.msra.mxu0 0
          %546 = vmatprep.mubr.bf16.mxu0 0
          %547 = vmatmul.mubr.bf16.gmra.mxu0 %v509
          %v548 = vpop.f32.mrf.mxu0
          %v549 = vadd.f32 %v437, %v548
          %v550 = vpop.f32.mrf.mxu0
          %v551 = vpop.f32.mrf.mxu0
          %v552 = vpop.f32.mrf.mxu0
          %553 = vdwg.mxu0
          %vm554 = vcmask 64512
          %v555 = vsel %vm554, %v503, -inf
          %556 = vmax.xlane.f32.xlu0 %v555
          %v557 = vpop.xlane.xlu0 %556
          %v558 = vsel %vm554, %v549, -inf
          %559 = vmax.xlane.f32.xlu0 %v558
          %v560 = vpop.xlane.xlu0 %559
          %v561 = vsub.f32 %v503, %v557
          %v562 = vsub.f32 %v549, %v560
          %v563 = vmul.f32 %v561, 1.442695
          %v564 = vpow.pop %v563
          %v565 = vmul.f32 %v562, 1.442695
          %v566 = vpow.pop %v565
          %v567 = vsel %vm554, %v564, 0.0
          %568 = vadd.xlane.f32.xlu0 %v567
          %v569 = vpop.xlane.xlu0 %568
          %v570 = vsel %vm554, %v566, 0.0
          %571 = vadd.xlane.f32.xlu0 %v570
          %v572 = vpop.xlane.xlu0 %571
          %v573 = vrcp.pop %v569
          %v574 = vrcp.pop %v572
          %v575 = vmul.f32 %v564, %v573
          %v576 = vmul.f32 %v566, %v574
          %v577 = vpack.c.bf16 %v575, %v575
          %v578 = vpack.c.bf16 %v576, %v576
          %v580 = vsel %vm554, %v577, 0
          %vm582 = vcmask 1043456
          %v584 = vsel %vm582, %v459, 0
          %586 = vmatprep.subr.bf16.mxu0 0
          %587 = vmatpush1.bf16.msra.mxu0 0
          %588 = vmatprep.subr.bf16.mxu0 0
          %589 = vmatpush1.bf16.msra.mxu0 0
          %590 = vmatprep.subr.bf16.mxu0 0
          %591 = vmatpush1.bf16.msra.mxu0 0
          %592 = vmatprep.subr.bf16.mxu0 0
          %593 = vmatpush1.bf16.msra.mxu0 0
          %594 = vmatprep.subr.bf16.mxu0 0
          %595 = vmatpush1.bf16.msra.mxu0 0
          %596 = vmatprep.subr.bf16.mxu0 0
          %597 = vmatpush1.bf16.msra.mxu0 0
          %598 = vmatprep.subr.bf16.mxu0 0
          %599 = vmatpush1.bf16.msra.mxu0 0
          %600 = vmatprep.subr.bf16.mxu0 0
          %601 = vmatpush1.bf16.msra.mxu0 %v584
          %602 = vmatprep.subr.bf16.mxu0 0
          %603 = vmatpush2.bf16.msra.mxu0 0
          %604 = vmatprep.subr.bf16.mxu0 0
          %605 = vmatpush2.bf16.msra.mxu0 0
          %606 = vmatprep.subr.bf16.mxu0 0
          %607 = vmatpush2.bf16.msra.mxu0 0
          %608 = vmatprep.subr.bf16.mxu0 0
          %609 = vmatpush2.bf16.msra.mxu0 0
          %610 = vmatprep.subr.bf16.mxu0 0
          %611 = vmatpush2.bf16.msra.mxu0 0
          %612 = vmatprep.subr.bf16.mxu0 0
          %613 = vmatpush2.bf16.msra.mxu0 0
          %614 = vmatprep.subr.bf16.mxu0 0
          %615 = vmatpush2.bf16.msra.mxu0 0
          %616 = vmatprep.subr.bf16.mxu0 0
          %617 = vmatpush2.bf16.msra.mxu0 0
          %618 = vmatprep.mubr.bf16.mxu0 0
          %619 = vmatmul.mubr.bf16.gmra.mxu0 %v580
          %v620 = vpop.f32.mrf.mxu0
          %v621 = vadd.f32 0.0, %v620
          %v622 = vpop.f32.mrf.mxu0
          %v623 = vpop.f32.mrf.mxu0
          %v624 = vpop.f32.mrf.mxu0
          %625 = vdwg.mxu0
          %v627 = vsel %vm554, %v578, 0
          %v630 = vsel %vm582, %v460, 0
          %632 = vmatprep.subr.bf16.mxu0 0
          %633 = vmatpush1.bf16.msra.mxu0 0
          %634 = vmatprep.subr.bf16.mxu0 0
          %635 = vmatpush1.bf16.msra.mxu0 0
          %636 = vmatprep.subr.bf16.mxu0 0
          %637 = vmatpush1.bf16.msra.mxu0 0
          %638 = vmatprep.subr.bf16.mxu0 0
          %639 = vmatpush1.bf16.msra.mxu0 0
          %640 = vmatprep.subr.bf16.mxu0 0
          %641 = vmatpush1.bf16.msra.mxu0 0
          %642 = vmatprep.subr.bf16.mxu0 0
          %643 = vmatpush1.bf16.msra.mxu0 0
          %644 = vmatprep.subr.bf16.mxu0 0
          %645 = vmatpush1.bf16.msra.mxu0 0
          %646 = vmatprep.subr.bf16.mxu0 0
          %647 = vmatpush1.bf16.msra.mxu0 %v630
          %648 = vmatprep.subr.bf16.mxu0 0
          %649 = vmatpush2.bf16.msra.mxu0 0
          %650 = vmatprep.subr.bf16.mxu0 0
          %651 = vmatpush2.bf16.msra.mxu0 0
          %652 = vmatprep.subr.bf16.mxu0 0
          %653 = vmatpush2.bf16.msra.mxu0 0
          %654 = vmatprep.subr.bf16.mxu0 0
          %655 = vmatpush2.bf16.msra.mxu0 0
          %656 = vmatprep.subr.bf16.mxu0 0
          %657 = vmatpush2.bf16.msra.mxu0 0
          %658 = vmatprep.subr.bf16.mxu0 0
          %659 = vmatpush2.bf16.msra.mxu0 0
          %660 = vmatprep.subr.bf16.mxu0 0
          %661 = vmatpush2.bf16.msra.mxu0 0
          %662 = vmatprep.subr.bf16.mxu0 0
          %663 = vmatpush2.bf16.msra.mxu0 0
          %664 = vmatprep.mubr.bf16.mxu0 0
          %665 = vmatmul.mubr.bf16.gmra.mxu0 %v627
          %v666 = vpop.f32.mrf.mxu0
          %v667 = vadd.f32 0.0, %v666
          %v668 = vpop.f32.mrf.mxu0
          %v669 = vpop.f32.mrf.mxu0
          %v670 = vpop.f32.mrf.mxu0
          %671 = vdwg.mxu0
          %v672 = vpack.c.bf16 %v667, %v621
          %v674 = vunpack.c.l.b16 %v672
          %v675 = vunpack.c.h.b16 %v672
          %v676 = vpack.c.b16 %v674, %v674
          %v677 = vpack.c.b16 %v675, %v675
          %s680 = smul.addr %s444, 4
          %s681 = scalar_lea.vmem [#allocation3], %s680
          %682 = vst.msk [vmem:[%s681] sm:$0xf] %vm383, %v676
          %683 = vst.msk [vmem:[%s681 + $0x4] sm:$0xf] %vm383, %v677
        $region61: #{tpu_custom_call.1} parent=43 // loop_footer
          %s443 = sadd.s32 1, %s439
        $region62: #{tpu_custom_call.1} parent=43 // loop_footer_branch
          %438 = sbr.rel target = $region58
        $region63: #{tpu_custom_call.1} parent=43 // loop_exit
          _
        %v684 = vld [vmem:[#allocation3] sm:$0xf]
        %v685 = vld [vmem:[#allocation3 + $0x4] sm:$0xf]
        %s686 = scalar_lea.vmem [#allocation3], 8
        %v687 = vld [vmem:[%s686] sm:$0xf]
        %v688 = vld [vmem:[%s686 + $0x4] sm:$0xf]
        %v691 = vunpack.c.l.b16 %v684
        %v692 = vunpack.c.l.b16 %v685
        %v693 = vpack.c.b16 %v692, %v691
        %v696 = vunpack.c.l.b16 %v687
        %v697 = vunpack.c.l.b16 %v688
        %v698 = vpack.c.b16 %v697, %v696
        %699 = vrot.lane.b32.xlu0 %v698, 16
        %v700 = vpop.permute.xlu0 %699
        %vm701 = vcmask 130048
        %v704 = vsel %vm701, %v693, %v700
        %v705 = vld [vmem:[#allocation10] sm:$0xf]
        %v706 = vld [vmem:[#allocation10 + $0x4] sm:$0xf]
        %v707 = vld [vmem:[#allocation10 + $0x8] sm:$0xf]
        %v708 = vld [vmem:[#allocation10 + $0xc] sm:$0xf]
        %v709 = vld [vmem:[%s4] sm:$0x1]
        %v711 = vlaneseq
        %v712 = vshrl.u32 %v711, 7
        %v713 = vsub.s32 0, %v712
        %v714 = vrot.slane %v709, %v713
        %v720 = vunpack.c.l.b16 %v705
        %v721 = vunpack.c.l.b16 %v706
        %v722 = vunpack.c.l.b16 %v707
        %v723 = vunpack.c.l.b16 %v708
        %v724 = vpack.c.b16 %v721, %v720
        %v725 = vpack.c.b16 %v723, %v722
        %v728 = vsel %vm327, %v704, 0
        %730 = vmatprep.subr.bf16.mxu0 0
        %731 = vmatpush1.bf16.msra.mxu0 0
        %732 = vmatprep.subr.bf16.mxu0 0
        %733 = vmatpush1.bf16.msra.mxu0 0
        %734 = vmatprep.subr.bf16.mxu0 0
        %735 = vmatpush1.bf16.msra.mxu0 0
        %736 = vmatprep.subr.bf16.mxu0 0
        %737 = vmatpush1.bf16.msra.mxu0 0
        %738 = vmatprep.subr.bf16.mxu0 0
        %739 = vmatpush1.bf16.msra.mxu0 0
        %740 = vmatprep.subr.bf16.mxu0 0
        %741 = vmatpush1.bf16.msra.mxu0 0
        %742 = vmatprep.subr.bf16.mxu0 0
        %743 = vmatpush1.bf16.msra.mxu0 %v725
        %744 = vmatprep.subr.bf16.mxu0 0
        %745 = vmatpush1.bf16.msra.mxu0 %v724
        %746 = vmatprep.subr.bf16.mxu0 0
        %747 = vmatpush2.bf16.msra.mxu0 0
        %748 = vmatprep.subr.bf16.mxu0 0
        %749 = vmatpush2.bf16.msra.mxu0 0
        %750 = vmatprep.subr.bf16.mxu0 0
        %751 = vmatpush2.bf16.msra.mxu0 0
        %752 = vmatprep.subr.bf16.mxu0 0
        %753 = vmatpush2.bf16.msra.mxu0 0
        %754 = vmatprep.subr.bf16.mxu0 0
        %755 = vmatpush2.bf16.msra.mxu0 0
        %756 = vmatprep.subr.bf16.mxu0 0
        %757 = vmatpush2.bf16.msra.mxu0 0
        %758 = vmatprep.subr.bf16.mxu0 0
        %759 = vmatpush2.bf16.msra.mxu0 0
        %760 = vmatprep.subr.bf16.mxu0 0
        %761 = vmatpush2.bf16.msra.mxu0 0
        %762 = vmatprep.mubr.bf16.mxu0 0
        %763 = vmatmul.mubr.bf16.gmra.mxu0 %v728
        %v764 = vpop.f32.mrf.mxu0
        %v765 = vadd.f32 %v714, %v764
        %v766 = vpop.f32.mrf.mxu0
        %v767 = vpop.f32.mrf.mxu0
        %v768 = vadd.f32 %v714, %v767
        %v769 = vpop.f32.mrf.mxu0
        %770 = vdwg.mxu0
        %771 = vst.msk [vmem:[%s299] sm:$0xff] %vm327, %v765
        %772 = vst.msk [vmem:[%s299 + $0x8] sm:$0xff] %vm327, %v768
        %s773 = sand.u32 %s164, 1
        %s774 = scalar_lea.sflag [#allocation7], %s773
        %s775 = sand.u32 %s164, 1
        %s776 = smul.addr %s775, 16
        %s777 = scalar_lea.vmem [#allocation11], %s776
        // Predicated region
        $region64: #{tpu_custom_call.1} parent=43 // pred_check
          %p778 = pneg %p174
        $region65: #{tpu_custom_call.1} parent=43 // pred_check_branch
          %780 = sbr.rel (%p778) target = $region67
        $region66: #{tpu_custom_call.1} parent=43 // pred_region
          %s781 = smul.u32 2, %s25
          %s783 = ssub.s32 256, 256
          %784 = vsyncadd %s774, %s783
          %s785 = smul.addr %s781, 128
          %s786 = scalar_lea.hbm %s6, %s785
          %s787 = sshll.u32 %s777, 4
          %s788 = int_to_ptr.vmem [resolvable:$true] %s787
          %793 = dma.vmem_to_hbm [thread:$0]  %s788, 256, %s786, %s774, 128, 128, 8
        $region67: #{tpu_custom_call.1} parent=43 // pred_fallthru
          _
      $region44: #{tpu_custom_call.1} parent=5 // pred_fallthru
        _
      %p794 = scmp.le.s32.totalorder 2, %s20
      // Predicated region
      $region68: #{tpu_custom_call.1} parent=5 // pred_check
        %p795 = pneg %p794
      $region69: #{tpu_custom_call.1} parent=5 // pred_check_branch
        %797 = sbr.rel (%p795) target = $region71
      $region70: #{tpu_custom_call.1} parent=5 // pred_region
        %s798 = ssub.s32 %s20, 2
        // Predicated region
        $region72: #{tpu_custom_call.1} parent=70 // pred_check
          %p799 = pneg %p180
        $region73: #{tpu_custom_call.1} parent=70 // pred_check_branch
          %801 = sbr.rel (%p799) target = $region75
        $region74: #{tpu_custom_call.1} parent=70 // pred_region
          %s802 = sand.u32 %s165, 1
          %s803 = scalar_lea.sflag [#allocation7], %s802
          %s804 = sand.u32 %s165, 1
          %s805 = smul.addr %s804, 16
          %s806 = scalar_lea.vmem [#allocation11], %s805
          %807 = dma.done %s803, 256
        $region75: #{tpu_custom_call.1} parent=70 // pred_fallthru
          _
      $region71: #{tpu_custom_call.1} parent=5 // pred_fallthru
        _
    $region6: #{tpu_custom_call.1} parent=1 // loop_footer
      %s24 = sadd.s32 1, %s20
    $region7: #{tpu_custom_call.1} parent=1 // loop_footer_branch
      %19 = sbr.rel target = $region3
    $region8: #{tpu_custom_call.1} parent=1 // loop_exit
      _
    %808 = vsyncpa [#allocation6], 1
    %s809 = scalar_lea.sflag [#allocation6], 1
    %810 = vsyncpa %s809, 1
    %811 = vsyncpa [#allocation9], 1
    %812 = vsyncpa [#allocation7], 1
    %s813 = scalar_lea.sflag [#allocation7], 1
    %814 = vsyncpa %s813, 1

</llo_original>
